<compile_context>
chip_gen: v7x
topology: tpu7x:2x2x1
jax: 0.10.0
libtpu: 0.0.40
codegen_flags: <defaults>
</compile_context>

<pallas_src>
import jax
import jax.numpy as jnp
from jax.experimental import pallas as pl
from jax.experimental.pallas import tpu as pltpu


def _round_up(x, m):
    return ((x + m - 1) // m) * m


def _policy_reps_kernel(x_ref, w1_ref, b1_ref, w2_ref, b2_ref, out_ref):
    x = x_ref[...]                                               # (block_b, num_inputs) f32

    # linear1 + leaky_relu (F.leaky_relu default negative_slope = 0.01)
    h = jnp.dot(x, w1_ref[...], preferred_element_type=jnp.float32) + b1_ref[...]
    h = jnp.where(h > 0, h, 0.01 * h)

    # linear2 into the lane-dense padded action slab (padded columns carry a -1e30 bias)
    logits = jnp.dot(h, w2_ref[...], preferred_element_type=jnp.float32) + b2_ref[...]

    # numerically stable softmax over the (padded) action axis
    m = jnp.max(logits, axis=-1, keepdims=True)
    e = jnp.exp(logits - m)                                      # padded cols -> exactly 0
    s = jnp.sum(e, axis=-1, keepdims=True)
    inv = pl.reciprocal(s, approx=True)                          # EUP slot
    inv = inv * (2.0 - s * inv)                                  # one Newton step -> f32 accurate
    out_ref[...] = e * inv


@jax.jit
def policy_reps_forward_batched(states, w1, b1, w2, b2):
    """states: (B, num_inputs). w1: (hidden, num_inputs), w2: (num_actions, hidden).
    Returns softmax probabilities of shape (B, num_actions)."""
    B, num_inputs = states.shape
    hidden = w1.shape[0]
    num_actions = w2.shape[0]

    # Lane-dense output slab width (multiple of 128 lanes -> unmasked stores).
    a_pad = _round_up(max(num_actions, 1), 128)

    # Batch tile: multiple of 8 sublanes, capped at 256 rows per tile.
    block_b = min(256, _round_up(B, 8))
    b_pad = _round_up(B, block_b)

    x = states.astype(jnp.float32)
    if b_pad != B:
        x = jnp.pad(x, ((0, b_pad - B), (0, 0)))

    w1_t = w1.astype(jnp.float32).T                              # (num_inputs, hidden)
    b1_r = b1.astype(jnp.float32).reshape(1, hidden)
    # Pad W2^T / b2 to the 128-wide action slab; padded bias = -1e30 so that
    # exp(logit - max) underflows to exactly 0 for the padded columns.
    w2_t = jnp.zeros((hidden, a_pad), jnp.float32).at[:, :num_actions].set(
        w2.astype(jnp.float32).T)
    b2_r = jnp.full((1, a_pad), -1e30, jnp.float32).at[:, :num_actions].set(
        b2.astype(jnp.float32).reshape(1, num_actions))

    out = pl.pallas_call(
        _policy_reps_kernel,
        out_shape=jax.ShapeDtypeStruct((b_pad, a_pad), jnp.float32),
        grid=(b_pad // block_b,),
        in_specs=[
            pl.BlockSpec((block_b, num_inputs), lambda i: (i, 0)),   # states tile
            pl.BlockSpec((num_inputs, hidden), lambda i: (0, 0)),    # W1^T (VMEM-resident)
            pl.BlockSpec((1, hidden), lambda i: (0, 0)),             # b1
            pl.BlockSpec((hidden, a_pad), lambda i: (0, 0)),         # W2^T (padded)
            pl.BlockSpec((1, a_pad), lambda i: (0, 0)),              # b2   (padded)
        ],
        out_specs=pl.BlockSpec((block_b, a_pad), lambda i: (i, 0)),
        compiler_params=pltpu.CompilerParams(
            dimension_semantics=("parallel",)),
    )(x, w1_t, b1_r, w2_t, b2_r)

    return out[:B, :num_actions]


@jax.jit
def policy_reps_forward(state, w1, b1, w2, b2):
    """PyTorch-equivalent forward: state (num_inputs,) -> probs (1, num_actions)."""
    states = jnp.asarray(state, jnp.float32).reshape(1, -1)      # unsqueeze(0)
    return policy_reps_forward_batched(states, w1, b1, w2, b2)


def _xavier_uniform(key, shape):
    # torch.nn.init.xavier_uniform_ for a Linear weight (out_features, in_features)
    fan_out, fan_in = shape
    bound = (6.0 / (fan_in + fan_out)) ** 0.5
    return jax.random.uniform(key, shape, jnp.float32, -bound, bound)


def _linear_bias(key, fan_in, out_features):
    # PyTorch nn.Linear default bias init: U(-1/sqrt(fan_in), 1/sqrt(fan_in))
    bound = 1.0 / (fan_in ** 0.5)
    return jax.random.uniform(key, (out_features,), jnp.float32, -bound, bound)


if __name__ == "__main__":
    num_inputs, num_actions, hidden_size = 8, 2, 32

    key = jax.random.PRNGKey(0)
    k_state, k_w1, k_b1, k_w2, k_b2, k_batch = jax.random.split(key, 6)

    state = jax.random.normal(k_state, (num_inputs,), jnp.float32)
    w1 = _xavier_uniform(k_w1, (hidden_size, num_inputs))
    b1 = _linear_bias(k_b1, num_inputs, hidden_size)
    w2 = _xavier_uniform(k_w2, (num_actions, hidden_size))
    b2 = _linear_bias(k_b2, hidden_size, num_actions)

    def reference(xs):
        h = xs @ w1.T + b1
        h = jnp.where(h > 0, h, 0.01 * h)
        logits = h @ w2.T + b2
        return jax.nn.softmax(logits, axis=-1)

    # 1) PyTorch-semantics path: single state -> (1, num_actions)
    probs = jax.block_until_ready(policy_reps_forward(state, w1, b1, w2, b2))
    probs_ref = reference(state.reshape(1, -1))
    assert probs.shape == (1, num_actions)
    assert jnp.allclose(probs, probs_ref, atol=1e-5), (probs, probs_ref)
    assert jnp.allclose(jnp.sum(probs), 1.0, atol=1e-5)

    # 2) Batched path: B not a multiple of the tile, exercises padding + 2-step grid.
    B = 300
    states = jax.random.normal(k_batch, (B, num_inputs), jnp.float32)
    probs_b = jax.block_until_ready(
        policy_reps_forward_batched(states, w1, b1, w2, b2))
    probs_b_ref = reference(states)
    assert probs_b.shape == (B, num_actions)
    assert jnp.allclose(probs_b, probs_b_ref, atol=1e-5), \
        float(jnp.max(jnp.abs(probs_b - probs_b_ref)))
    assert jnp.allclose(jnp.sum(probs_b, axis=-1), 1.0, atol=1e-5)

    print("KERNEL_OK")
</pallas_src>

<mosaic_0001>
module attributes {stable_mosaic.version = 11 : i64} {
  func.func @_policy_reps_kernel(%arg0: i32, %arg1: memref<8x8xf32, #tpu.memory_space<vmem>>, %arg2: memref<8x32xf32, #tpu.memory_space<vmem>>, %arg3: memref<1x32xf32, #tpu.memory_space<vmem>>, %arg4: memref<32x128xf32, #tpu.memory_space<vmem>>, %arg5: memref<1x128xf32, #tpu.memory_space<vmem>>, %arg6: memref<8x128xf32, #tpu.memory_space<vmem>>) attributes {dimension_semantics = [#tpu.dimension_semantics<parallel>], iteration_bounds = array<i64: 1>, scalar_prefetch = 0 : i64, scratch_operands = 0 : i64, tpu.core_type = #tpu.core_type<tc>, window_params = [{transform_indices = @transform_0, window_bounds = array<i64: 8, 8>}, {pipeline_mode = #tpu.pipeline_mode<synchronous>, transform_indices = @transform_1, window_bounds = array<i64: 8, 32>}, {pipeline_mode = #tpu.pipeline_mode<synchronous>, transform_indices = @transform_2, window_bounds = array<i64: 1, 32>}, {pipeline_mode = #tpu.pipeline_mode<synchronous>, transform_indices = @transform_3, window_bounds = array<i64: 32, 128>}, {pipeline_mode = #tpu.pipeline_mode<synchronous>, transform_indices = @transform_4, window_bounds = array<i64: 1, 128>}, {transform_indices = @transform_5, window_bounds = array<i64: 8, 128>}]} {
    %c0 = arith.constant 0 : index
    %c0_0 = arith.constant 0 : index
    %0 = vector.load %arg1[%c0, %c0_0] : memref<8x8xf32, #tpu.memory_space<vmem>>, vector<8x8xf32>
    %c0_1 = arith.constant 0 : index
    %c0_2 = arith.constant 0 : index
    %1 = vector.load %arg2[%c0_1, %c0_2] : memref<8x32xf32, #tpu.memory_space<vmem>>, vector<8x32xf32>
    %cst = arith.constant dense<0.000000e+00> : vector<8x32xf32>
    %2 = tpu.matmul %0, %1, %cst {dimension_numbers = #tpu.dot_dimension_numbers<[1], [0], [0], [1], [0, 0, 1, 1], [], []>} : vector<8x8xf32>, vector<8x32xf32>, vector<8x32xf32> -> vector<8x32xf32>
    %c0_3 = arith.constant 0 : index
    %c0_4 = arith.constant 0 : index
    %3 = vector.load %arg3[%c0_3, %c0_4] : memref<1x32xf32, #tpu.memory_space<vmem>>, vector<1x32xf32>
    %4 = vector.broadcast %3 : vector<1x32xf32> to vector<8x32xf32>
    %5 = arith.addf %2, %4 : vector<8x32xf32>
    %cst_5 = arith.constant 0.000000e+00 : f32
    %6 = vector.broadcast %cst_5 : f32 to vector<8x32xf32>
    %7 = arith.cmpf ogt, %5, %6 : vector<8x32xf32>
    %cst_6 = arith.constant 0.00999999977 : f32
    %8 = vector.broadcast %cst_6 : f32 to vector<8x32xf32>
    %9 = arith.mulf %8, %5 : vector<8x32xf32>
    %10 = arith.select %7, %5, %9 : vector<8x32xi1>, vector<8x32xf32>
    %c0_7 = arith.constant 0 : index
    %c0_8 = arith.constant 0 : index
    %11 = vector.load %arg4[%c0_7, %c0_8] : memref<32x128xf32, #tpu.memory_space<vmem>>, vector<32x128xf32>
    %cst_9 = arith.constant dense<0.000000e+00> : vector<8x128xf32>
    %12 = tpu.matmul %10, %11, %cst_9 {dimension_numbers = #tpu.dot_dimension_numbers<[1], [0], [0], [1], [0, 0, 1, 1], [], []>} : vector<8x32xf32>, vector<32x128xf32>, vector<8x128xf32> -> vector<8x128xf32>
    %c0_10 = arith.constant 0 : index
    %c0_11 = arith.constant 0 : index
    %13 = vector.load %arg5[%c0_10, %c0_11] : memref<1x128xf32, #tpu.memory_space<vmem>>, vector<1x128xf32>
    %14 = vector.broadcast %13 : vector<1x128xf32> to vector<8x128xf32>
    %15 = arith.addf %12, %14 : vector<8x128xf32>
    %cst_12 = arith.constant dense<0xFF800000> : vector<8xf32>
    %16 = vector.multi_reduction <maximumf>, %15, %cst_12 [1] : vector<8x128xf32> to vector<8xf32>
    %17 = vector.shape_cast %16 : vector<8xf32> to vector<8x1xf32>
    %18 = vector.broadcast %17 : vector<8x1xf32> to vector<8x128xf32>
    %19 = arith.subf %15, %18 : vector<8x128xf32>
    %20 = math.exp %19 : vector<8x128xf32>
    %cst_13 = arith.constant dense<0.000000e+00> : vector<8xf32>
    %21 = vector.multi_reduction <add>, %20, %cst_13 [1] : vector<8x128xf32> to vector<8xf32>
    %22 = vector.shape_cast %21 : vector<8xf32> to vector<8x1xf32>
    %23 = tpu.reciprocal %22 {approx = true} : vector<8x1xf32> -> vector<8x1xf32>
    %24 = arith.mulf %22, %23 : vector<8x1xf32>
    %cst_14 = arith.constant 2.000000e+00 : f32
    %25 = vector.broadcast %cst_14 : f32 to vector<8x1xf32>
    %26 = arith.subf %25, %24 : vector<8x1xf32>
    %27 = arith.mulf %23, %26 : vector<8x1xf32>
    %28 = vector.broadcast %27 : vector<8x1xf32> to vector<8x128xf32>
    %29 = arith.mulf %20, %28 : vector<8x128xf32>
    %c0_15 = arith.constant 0 : index
    %c0_16 = arith.constant 0 : index
    %30 = vector.load %arg6[%c0_15, %c0_16] : memref<8x128xf32, #tpu.memory_space<vmem>>, vector<8x128xf32>
    tpu.vector_store %arg6[%c0_15, %c0_16], %29 {strides = array<i32>} : memref<8x128xf32, #tpu.memory_space<vmem>>, vector<8x128xf32>,
    return
  }
  func.func @transform_0(%arg0: i32) -> (i32, i32) {
    %c0_i32 = arith.constant 0 : i32
    %c0_i32_0 = arith.constant 0 : i32
    return %arg0, %c0_i32 : i32, i32
  }
  func.func @transform_1(%arg0: i32) -> (i32, i32) {
    %c0_i32 = arith.constant 0 : i32
    %c0_i32_0 = arith.constant 0 : i32
    %c0_i32_1 = arith.constant 0 : i32
    return %c0_i32, %c0_i32_0 : i32, i32
  }
  func.func @transform_2(%arg0: i32) -> (i32, i32) {
    %c0_i32 = arith.constant 0 : i32
    %c0_i32_0 = arith.constant 0 : i32
    %c0_i32_1 = arith.constant 0 : i32
    return %c0_i32, %c0_i32_0 : i32, i32
  }
  func.func @transform_3(%arg0: i32) -> (i32, i32) {
    %c0_i32 = arith.constant 0 : i32
    %c0_i32_0 = arith.constant 0 : i32
    %c0_i32_1 = arith.constant 0 : i32
    return %c0_i32, %c0_i32_0 : i32, i32
  }
  func.func @transform_4(%arg0: i32) -> (i32, i32) {
    %c0_i32 = arith.constant 0 : i32
    %c0_i32_0 = arith.constant 0 : i32
    %c0_i32_1 = arith.constant 0 : i32
    return %c0_i32, %c0_i32_0 : i32, i32
  }
  func.func @transform_5(%arg0: i32) -> (i32, i32) {
    %c0_i32 = arith.constant 0 : i32
    %c0_i32_0 = arith.constant 0 : i32
    return %arg0, %c0_i32 : i32, i32
  }
}

</mosaic_0001>

<llo_original>
// kernel: policy_reps_forward_batched.1
$region0: #{policy_reps_forward_batched.1}
  #allocation0 [shape = 'u32[]', space=smem, size = 0x4, offset = 0x4, fixed_abs, tag = 'smem constant byte address 0x4 - core index']
  #allocation1 [shape = 'u32[144,128]{1,0:T(1,128)}', space=vmem, size = 0x12000, scoped, tag = 'internal scratch']
  %s0 = inlined_call_operand.vmem [shape: f32[8,8], index: 0, kind: input, shape index: {}]
  %s1 = inlined_call_operand.vmem [shape: f32[8,32], index: 1, kind: input, shape index: {}]
  %s2 = inlined_call_operand.vmem [shape: f32[1,32], index: 2, kind: input, shape index: {}]
  %s3 = inlined_call_operand.vmem [shape: f32[32,128], index: 3, kind: input, shape index: {}]
  %s4 = inlined_call_operand.vmem [shape: f32[1,128], index: 4, kind: input, shape index: {}]
  %s5 = inlined_call_operand.vmem [shape: f32[8,128], index: 5, kind: output, shape index: {}]
  %s6 = sld [smem:[#allocation0]]
  $region30: #{policy_reps_forward_batched.1} parent=0
    _
  %s8 = ssub.s32 1, %s6
  %s9 = scalar_select 0, %s8, %s6
  // Predicated region
  $region2: #{policy_reps_forward_batched.1} parent=0 // pred_check
    _
  $region3: #{policy_reps_forward_batched.1} parent=0 // pred_check_branch
    %11 = sbr.rel (0) target = $region5
  $region4: #{policy_reps_forward_batched.1} parent=0 // pred_region
    _
  $region5: #{policy_reps_forward_batched.1} parent=0 // pred_fallthru
    _
  // Predicated region
  $region6: #{policy_reps_forward_batched.1} parent=0 // pred_check
    _
  $region7: #{policy_reps_forward_batched.1} parent=0 // pred_check_branch
    %13 = sbr.rel (0) target = $region9
  $region8: #{policy_reps_forward_batched.1} parent=0 // pred_region
    _
  $region9: #{policy_reps_forward_batched.1} parent=0 // pred_fallthru
    _
  // Predicated region
  $region10: #{policy_reps_forward_batched.1} parent=0 // pred_check
    _
  $region11: #{policy_reps_forward_batched.1} parent=0 // pred_check_branch
    %15 = sbr.rel (0) target = $region13
  $region12: #{policy_reps_forward_batched.1} parent=0 // pred_region
    _
  $region13: #{policy_reps_forward_batched.1} parent=0 // pred_fallthru
    _
  // Predicated region
  $region14: #{policy_reps_forward_batched.1} parent=0 // pred_check
    _
  $region15: #{policy_reps_forward_batched.1} parent=0 // pred_check_branch
    %17 = sbr.rel (0) target = $region17
  $region16: #{policy_reps_forward_batched.1} parent=0 // pred_region
    _
  $region17: #{policy_reps_forward_batched.1} parent=0 // pred_fallthru
    _
  // Predicated region
  $region18: #{policy_reps_forward_batched.1} parent=0 // pred_check
    _
  $region19: #{policy_reps_forward_batched.1} parent=0 // pred_check_branch
    %19 = sbr.rel (0) target = $region21
  $region20: #{policy_reps_forward_batched.1} parent=0 // pred_region
    _
  $region21: #{policy_reps_forward_batched.1} parent=0 // pred_fallthru
    _
  %v20 = vld [vmem:[%s0] sm:$0xff]
  %v21 = vld [vmem:[%s1] sm:$0xff]
  %v22 = vld [vmem:[%s2] sm:$0x1]
  %v24 = vlaneseq
  %v25 = vshrl.u32 %v24, 7
  %v26 = vsub.s32 0, %v25
  %v27 = vrot.slane %v22, %v26
  %vm29 = vcmask 64512
  %v31 = vsel %vm29, %v20, 0
  %33 = vmatprep.subr.mxu0 0.0
  %34 = vmatpush1.msra.mxu0 %v21
  %35 = vmatprep.subr.mxu0 0.0
  %36 = vmatpush1.msra.mxu0 0.0
  %37 = vmatprep.subr.mxu0 0.0
  %38 = vmatpush1.msra.mxu0 0.0
  %39 = vmatprep.subr.mxu0 0.0
  %40 = vmatpush1.msra.mxu0 0.0
  %41 = vmatprep.subr.mxu0 0.0
  %42 = vmatpush1.msra.mxu0 0.0
  %43 = vmatprep.subr.mxu0 0.0
  %44 = vmatpush1.msra.mxu0 0.0
  %45 = vmatprep.subr.mxu0 0.0
  %46 = vmatpush1.msra.mxu0 0.0
  %47 = vmatprep.subr.mxu0 0.0
  %48 = vmatpush1.msra.mxu0 0.0
  %49 = vmatprep.subr.mxu0 0.0
  %50 = vmatpush1.msra.mxu0 0.0
  %51 = vmatprep.subr.mxu0 0.0
  %52 = vmatpush1.msra.mxu0 0.0
  %53 = vmatprep.subr.mxu0 0.0
  %54 = vmatpush1.msra.mxu0 0.0
  %55 = vmatprep.subr.mxu0 0.0
  %56 = vmatpush1.msra.mxu0 0.0
  %57 = vmatprep.subr.mxu0 0.0
  %58 = vmatpush1.msra.mxu0 0.0
  %59 = vmatprep.subr.mxu0 0.0
  %60 = vmatpush1.msra.mxu0 0.0
  %61 = vmatprep.subr.mxu0 0.0
  %62 = vmatpush1.msra.mxu0 0.0
  %63 = vmatprep.subr.mxu0 0.0
  %64 = vmatpush1.msra.mxu0 0.0
  %65 = vmatprep.subr.mxu0 0.0
  %66 = vmatpush1.msra.mxu0 0.0
  %67 = vmatprep.subr.mxu0 0.0
  %68 = vmatpush1.msra.mxu0 0.0
  %69 = vmatprep.subr.mxu0 0.0
  %70 = vmatpush1.msra.mxu0 0.0
  %71 = vmatprep.subr.mxu0 0.0
  %72 = vmatpush1.msra.mxu0 0.0
  %73 = vmatprep.subr.mxu0 0.0
  %74 = vmatpush1.msra.mxu0 0.0
  %75 = vmatprep.subr.mxu0 0.0
  %76 = vmatpush1.msra.mxu0 0.0
  %77 = vmatprep.subr.mxu0 0.0
  %78 = vmatpush1.msra.mxu0 0.0
  %79 = vmatprep.subr.mxu0 0.0
  %80 = vmatpush1.msra.mxu0 0.0
  %81 = vmatprep.subr.mxu0 0.0
  %82 = vmatpush1.msra.mxu0 0.0
  %83 = vmatprep.subr.mxu0 0.0
  %84 = vmatpush1.msra.mxu0 0.0
  %85 = vmatprep.subr.mxu0 0.0
  %86 = vmatpush1.msra.mxu0 0.0
  %87 = vmatprep.subr.mxu0 0.0
  %88 = vmatpush1.msra.mxu0 0.0
  %89 = vmatprep.subr.mxu0 0.0
  %90 = vmatpush1.msra.mxu0 0.0
  %91 = vmatprep.subr.mxu0 0.0
  %92 = vmatpush1.msra.mxu0 0.0
  %93 = vmatprep.subr.mxu0 0.0
  %94 = vmatpush1.msra.mxu0 0.0
  %95 = vmatprep.subr.mxu0 0.0
  %96 = vmatpush1.msra.mxu0 0.0
  %97 = vmatprep.mubr.f32.mxu0 0.0
  %98 = vmatmul.mubr.f32.gmra.mrb[0].mxu0 %v31
  %v99 = vpop.f32.mrb[0].mxu0
  %v100 = vadd.f32 %v27, %v99
  %v101 = vpop.f32.mrb[0].mxu0
  %102 = vdwg.mxu0
  %vm103 = vcmp.gt.f32.partialorder %v100, 0.0
  %v104 = vmul.f32 %v100, 0.01
  %v105 = vsel %vm103, %v100, %v104
  %v106 = vld [vmem:[%s3] sm:$0xff]
  %v107 = vld [vmem:[%s3 + $0x8] sm:$0xff]
  %v108 = vld [vmem:[%s3 + $0x10] sm:$0xff]
  %v109 = vld [vmem:[%s3 + $0x18] sm:$0xff]
  %v110 = vld [vmem:[%s4] sm:$0x1]
  %v112 = vlaneseq
  %v113 = vshrl.u32 %v112, 7
  %v114 = vsub.s32 0, %v113
  %v115 = vrot.slane %v110, %v114
  %vm117 = vcmask 261120
  %v119 = vsel %vm117, %v105, 0
  %121 = vmatprep.subr.mxu0 0.0
  %122 = vmatpush1.msra.mxu0 %v106
  %123 = vmatprep.subr.mxu0 0.0
  %124 = vmatpush1.msra.mxu0 %v107
  %125 = vmatprep.subr.mxu0 0.0
  %126 = vmatpush1.msra.mxu0 %v108
  %127 = vmatprep.subr.mxu0 0.0
  %128 = vmatpush1.msra.mxu0 %v109
  %129 = vmatprep.subr.mxu0 0.0
  %130 = vmatpush1.msra.mxu0 0.0
  %131 = vmatprep.subr.mxu0 0.0
  %132 = vmatpush1.msra.mxu0 0.0
  %133 = vmatprep.subr.mxu0 0.0
  %134 = vmatpush1.msra.mxu0 0.0
  %135 = vmatprep.subr.mxu0 0.0
  %136 = vmatpush1.msra.mxu0 0.0
  %137 = vmatprep.subr.mxu0 0.0
  %138 = vmatpush1.msra.mxu0 0.0
  %139 = vmatprep.subr.mxu0 0.0
  %140 = vmatpush1.msra.mxu0 0.0
  %141 = vmatprep.subr.mxu0 0.0
  %142 = vmatpush1.msra.mxu0 0.0
  %143 = vmatprep.subr.mxu0 0.0
  %144 = vmatpush1.msra.mxu0 0.0
  %145 = vmatprep.subr.mxu0 0.0
  %146 = vmatpush1.msra.mxu0 0.0
  %147 = vmatprep.subr.mxu0 0.0
  %148 = vmatpush1.msra.mxu0 0.0
  %149 = vmatprep.subr.mxu0 0.0
  %150 = vmatpush1.msra.mxu0 0.0
  %151 = vmatprep.subr.mxu0 0.0
  %152 = vmatpush1.msra.mxu0 0.0
  %153 = vmatprep.subr.mxu0 0.0
  %154 = vmatpush1.msra.mxu0 0.0
  %155 = vmatprep.subr.mxu0 0.0
  %156 = vmatpush1.msra.mxu0 0.0
  %157 = vmatprep.subr.mxu0 0.0
  %158 = vmatpush1.msra.mxu0 0.0
  %159 = vmatprep.subr.mxu0 0.0
  %160 = vmatpush1.msra.mxu0 0.0
  %161 = vmatprep.subr.mxu0 0.0
  %162 = vmatpush1.msra.mxu0 0.0
  %163 = vmatprep.subr.mxu0 0.0
  %164 = vmatpush1.msra.mxu0 0.0
  %165 = vmatprep.subr.mxu0 0.0
  %166 = vmatpush1.msra.mxu0 0.0
  %167 = vmatprep.subr.mxu0 0.0
  %168 = vmatpush1.msra.mxu0 0.0
  %169 = vmatprep.subr.mxu0 0.0
  %170 = vmatpush1.msra.mxu0 0.0
  %171 = vmatprep.subr.mxu0 0.0
  %172 = vmatpush1.msra.mxu0 0.0
  %173 = vmatprep.subr.mxu0 0.0
  %174 = vmatpush1.msra.mxu0 0.0
  %175 = vmatprep.subr.mxu0 0.0
  %176 = vmatpush1.msra.mxu0 0.0
  %177 = vmatprep.subr.mxu0 0.0
  %178 = vmatpush1.msra.mxu0 0.0
  %179 = vmatprep.subr.mxu0 0.0
  %180 = vmatpush1.msra.mxu0 0.0
  %181 = vmatprep.subr.mxu0 0.0
  %182 = vmatpush1.msra.mxu0 0.0
  %183 = vmatprep.subr.mxu0 0.0
  %184 = vmatpush1.msra.mxu0 0.0
  %185 = vmatprep.mubr.f32.mxu0 0.0
  %186 = vmatmul.mubr.f32.gmra.mrb[0].mxu0 %v119
  %v187 = vpop.f32.mrb[0].mxu0
  %v188 = vadd.f32 %v115, %v187
  %v189 = vpop.f32.mrb[0].mxu0
  %190 = vdwg.mxu0
  %191 = vmax.xlane.f32.xlu0 %v188
  %v192 = vpop.xlane.xlu0 %191
  %v193 = vsub.f32 %v188, %v192
  %v194 = vmul.f32 %v193, 1.442695
  %v195 = vpow.pop %v194
  %196 = vadd.xlane.f32.xlu0 %v195
  %v197 = vpop.xlane.xlu0 %196
  %v198 = vrcp.pop %v197
  %v199 = vmul.f32 %v197, %v198
  %v200 = vsub.f32 2.0, %v199
  %v201 = vmul.f32 %v198, %v200
  %v202 = vmul.f32 %v195, %v201
  %203 = vst [vmem:[%s5] sm:$0xff] %v202
  // Predicated region
  $region22: #{policy_reps_forward_batched.1} parent=0 // pred_check
    _
  $region23: #{policy_reps_forward_batched.1} parent=0 // pred_check_branch
    %205 = sbr.rel (0) target = $region25
  $region24: #{policy_reps_forward_batched.1} parent=0 // pred_region
    _
  $region25: #{policy_reps_forward_batched.1} parent=0 // pred_fallthru
    _
  // Predicated region
  $region26: #{policy_reps_forward_batched.1} parent=0 // pred_check
    _
  $region27: #{policy_reps_forward_batched.1} parent=0 // pred_check_branch
    %207 = sbr.rel (0) target = $region29
  $region28: #{policy_reps_forward_batched.1} parent=0 // pred_region
    _
  $region29: #{policy_reps_forward_batched.1} parent=0 // pred_fallthru
    _

</llo_original>
